<compile_context>
chip_gen: v5e
topology: v5e:2x2
jax: 0.10.0
libtpu: 0.0.40
codegen_flags: <defaults>
</compile_context>

<pallas_src>
import jax
import jax.numpy as jnp
from jax.experimental import pallas as pl
from jax.experimental.pallas import tpu as pltpu


def _round_up(n, m):
    return ((n + m - 1) // m) * m


def _pick_ff_tile(d_ff, max_ff_tile):
    """Largest lane-aligned divisor of d_ff not exceeding max_ff_tile."""
    if d_ff <= max_ff_tile:
        return d_ff
    t = (max_ff_tile // 128) * 128
    while t >= 128:
        if d_ff % t == 0:
            return t
        t -= 128
    return d_ff  # fall back to untiled d_ff


def _ffn_kernel(x_ref, gamma_ref, beta_ref, w1_ref, b1_ref, w2_ref, b2_ref,
                o_ref, acc_ref, xn_ref):
    j = pl.program_id(1)

    # LayerNorm once per row tile (j == 0); stash the normalized activations in
    # a compute-dtype scratch so the d_ff loop reuses them without recompute.
    @pl.when(j == 0)
    def _():
        x = x_ref[...].astype(jnp.float32)
        inv_d = 1.0 / x.shape[-1]
        s = jnp.sum(x, axis=-1, keepdims=True)
        s2 = jnp.sum(x * x, axis=-1, keepdims=True)
        mean = s * inv_d
        var = s2 * inv_d - mean * mean            # single-pass statistics
        xn = (x - mean) * jax.lax.rsqrt(var + 1e-5)
        xn = xn * gamma_ref[...] + beta_ref[...]
        xn_ref[...] = xn.astype(xn_ref.dtype)
        acc_ref[...] = jnp.zeros_like(acc_ref)

    # Linear1 tile (d_model -> ff_tile) on the MXU, bf16 operands / f32 acc.
    h = jnp.dot(xn_ref[...], w1_ref[...], preferred_element_type=jnp.float32)
    h = h + b1_ref[...]
    # Swish / SiLU in f32 (sigmoid on EUP, multiply on VPU).
    h = h * jax.nn.sigmoid(h)
    # TODO(synk): dropout_1 / dropout_2 are identity here (inference mode).

    # Linear2 tile (ff_tile -> d_model), accumulated in f32 scratch.
    acc_ref[...] += jnp.dot(h.astype(w2_ref.dtype), w2_ref[...],
                            preferred_element_type=jnp.float32)

    @pl.when(j == pl.num_programs(1) - 1)
    def _():
        o_ref[...] = (acc_ref[...] + b2_ref[...]).astype(o_ref.dtype)


def conformer_feed_forward(x, gamma, beta, w1, b1, w2, b2, *,
                           row_tile=256, max_ff_tile=2048,
                           compute_dtype=jnp.bfloat16):
    """x: (batch, time, d_model) -> (batch, time, d_model)."""
    batch, time, d_model = x.shape
    d_ff = w1.shape[1]
    rows = batch * time

    # Effective row tile: clamp to the (padded) row count, keep it sublane
    # aligned for packed dtypes (multiple of 16 covers bf16).
    rt = max(16, min(row_tile, _round_up(rows, 16)))
    rt = _round_up(rt, 16)
    rows_p = _round_up(rows, rt)
    ff_tile = _pick_ff_tile(d_ff, max_ff_tile)

    x2 = x.reshape(rows, d_model)
    if rows_p != rows:
        x2 = jnp.pad(x2, ((0, rows_p - rows), (0, 0)))

    f32 = jnp.float32
    gamma2 = gamma.reshape(1, d_model).astype(f32)
    beta2 = beta.reshape(1, d_model).astype(f32)
    b1_2 = b1.reshape(1, d_ff).astype(f32)
    b2_2 = b2.reshape(1, d_model).astype(f32)
    w1c = w1.astype(compute_dtype)
    w2c = w2.astype(compute_dtype)

    grid = (rows_p // rt, d_ff // ff_tile)

    # Explicit VMEM budget for the chosen tiling (double-buffered I/O + weights
    # + scratch), with 2x headroom, clamped to a v7x-safe ceiling.
    isz_x = jnp.dtype(x.dtype).itemsize
    isz_c = jnp.dtype(compute_dtype).itemsize
    vmem_est = (
        2 * rt * d_model * isz_x            # x tiles
        + 2 * rt * d_model * isz_x          # out tiles
        + 2 * d_model * ff_tile * isz_c     # W1 tiles
        + 2 * ff_tile * d_model * isz_c     # W2 tiles
        + rt * d_model * 4                  # f32 accumulator scratch
        + rt * d_model * isz_c              # normalized-activation scratch
        + 8 * (d_model + ff_tile) * 4       # gamma/beta/b1/b2 tiles
    )
    vmem_limit = int(min(max(2 * vmem_est, 32 * 1024 * 1024), 64 * 1024 * 1024))

    out2 = pl.pallas_call(
        _ffn_kernel,
        out_shape=jax.ShapeDtypeStruct((rows_p, d_model), x.dtype),
        grid_spec=pltpu.PrefetchScalarGridSpec(
            num_scalar_prefetch=0,
            grid=grid,
            in_specs=[
                pl.BlockSpec((rt, d_model), lambda i, j: (i, 0)),       # x tile
                pl.BlockSpec((1, d_model), lambda i, j: (0, 0)),        # gamma
                pl.BlockSpec((1, d_model), lambda i, j: (0, 0)),        # beta
                pl.BlockSpec((d_model, ff_tile), lambda i, j: (0, j)),  # W1 tile
                pl.BlockSpec((1, ff_tile), lambda i, j: (0, j)),        # b1 tile
                pl.BlockSpec((ff_tile, d_model), lambda i, j: (j, 0)),  # W2 tile
                pl.BlockSpec((1, d_model), lambda i, j: (0, 0)),        # b2
            ],
            out_specs=pl.BlockSpec((rt, d_model), lambda i, j: (i, 0)),
            scratch_shapes=[
                pltpu.VMEM((rt, d_model), jnp.float32),     # acc
                pltpu.VMEM((rt, d_model), compute_dtype),   # normalized x
            ],
        ),
        compiler_params=pltpu.CompilerParams(
            dimension_semantics=("parallel", "arbitrary"),
            vmem_limit_bytes=vmem_limit,
        ),
    )(x2, gamma2, beta2, w1c, b1_2, w2c, b2_2)

    if rows_p != rows:
        out2 = out2[:rows]
    return out2.reshape(batch, time, d_model)


def _reference(x, gamma, beta, w1, b1, w2, b2, compute_dtype=jnp.bfloat16):
    """Pure-JAX reference mirroring the kernel's dtype policy (bf16 MXU operands,
    f32 accumulation / elementwise)."""
    xf = x.astype(jnp.float32)
    mean = jnp.mean(xf, axis=-1, keepdims=True)
    var = jnp.mean((xf - mean) ** 2, axis=-1, keepdims=True)
    xn = (xf - mean) * jax.lax.rsqrt(var + 1e-5) * gamma + beta
    xn = xn.astype(compute_dtype)
    h = jnp.dot(xn, w1.astype(compute_dtype),
                preferred_element_type=jnp.float32) + b1
    h = h * jax.nn.sigmoid(h)
    y = jnp.dot(h.astype(compute_dtype), w2.astype(compute_dtype),
                preferred_element_type=jnp.float32) + b2
    return y.astype(x.dtype)


if __name__ == "__main__":
    # Small shapes consistent with the module's forward: (batch, time, d_model).
    batch, time, d_model, d_ff = 2, 8, 32, 64

    key = jax.random.PRNGKey(0)
    kx, kg, kb, kw1, kb1, kw2, kb2 = jax.random.split(key, 7)

    x = jax.random.normal(kx, (batch, time, d_model), dtype=jnp.float32)

    # Deterministic synthetic parameters (shapes match nn.LayerNorm / nn.Linear).
    gamma = 1.0 + 0.1 * jax.random.normal(kg, (d_model,), dtype=jnp.float32)
    beta = 0.1 * jax.random.normal(kb, (d_model,), dtype=jnp.float32)
    # PyTorch Linear stores weight as (out, in); we pass (in, out) so y = x @ W.
    w1 = 0.1 * jax.random.normal(kw1, (d_model, d_ff), dtype=jnp.float32)
    b1 = 0.1 * jax.random.normal(kb1, (d_ff,), dtype=jnp.float32)
    w2 = 0.1 * jax.random.normal(kw2, (d_ff, d_model), dtype=jnp.float32)
    b2 = 0.1 * jax.random.normal(kb2, (d_model,), dtype=jnp.float32)

    out = conformer_feed_forward(x, gamma, beta, w1, b1, w2, b2)
    out = jax.block_until_ready(out)

    ref = _reference(x, gamma, beta, w1, b1, w2, b2)
    assert out.shape == (batch, time, d_model)
    assert jnp.allclose(out, ref, atol=5e-3, rtol=5e-3), "mismatch vs reference"

    print("KERNEL_OK")
</pallas_src>

<mosaic_0001>
module attributes {stable_mosaic.version = 11 : i64} {
  func.func @_ffn_kernel(%arg0: i32, %arg1: i32, %arg2: memref<16x32xf32, #tpu.memory_space<vmem>>, %arg3: memref<1x32xf32, #tpu.memory_space<vmem>>, %arg4: memref<1x32xf32, #tpu.memory_space<vmem>>, %arg5: memref<32x64xbf16, #tpu.memory_space<vmem>>, %arg6: memref<1x64xf32, #tpu.memory_space<vmem>>, %arg7: memref<64x32xbf16, #tpu.memory_space<vmem>>, %arg8: memref<1x32xf32, #tpu.memory_space<vmem>>, %arg9: memref<16x32xf32, #tpu.memory_space<vmem>>, %arg10: memref<16x32xf32, #tpu.memory_space<vmem>>, %arg11: memref<16x32xbf16, #tpu.memory_space<vmem>>) attributes {dimension_semantics = [#tpu.dimension_semantics<parallel>, #tpu.dimension_semantics<arbitrary>], iteration_bounds = array<i64: 1, 1>, scalar_prefetch = 0 : i64, scratch_operands = 2 : i64, tpu.core_type = #tpu.core_type<tc>, window_params = [{transform_indices = @transform_0, window_bounds = array<i64: 16, 32>}, {pipeline_mode = #tpu.pipeline_mode<synchronous>, transform_indices = @transform_1, window_bounds = array<i64: 1, 32>}, {pipeline_mode = #tpu.pipeline_mode<synchronous>, transform_indices = @transform_2, window_bounds = array<i64: 1, 32>}, {transform_indices = @transform_3, window_bounds = array<i64: 32, 64>}, {transform_indices = @transform_4, window_bounds = array<i64: 1, 64>}, {transform_indices = @transform_5, window_bounds = array<i64: 64, 32>}, {pipeline_mode = #tpu.pipeline_mode<synchronous>, transform_indices = @transform_6, window_bounds = array<i64: 1, 32>}, {transform_indices = @transform_7, window_bounds = array<i64: 16, 32>}]} {
    %c0_i32 = arith.constant 0 : i32
    %0 = arith.cmpi eq, %arg1, %c0_i32 : i32
    %1 = arith.extui %0 : i1 to i32
    %c0_i32_0 = arith.constant 0 : i32
    %2 = arith.cmpi ne, %1, %c0_i32_0 : i32
    scf.if %2 {
      %c0_16 = arith.constant 0 : index
      %c0_17 = arith.constant 0 : index
      %24 = vector.load %arg2[%c0_16, %c0_17] : memref<16x32xf32, #tpu.memory_space<vmem>>, vector<16x32xf32>
      %cst_18 = arith.constant dense<0.000000e+00> : vector<16xf32>
      %25 = vector.multi_reduction <add>, %24, %cst_18 [1] : vector<16x32xf32> to vector<16xf32>
      %26 = vector.shape_cast %25 : vector<16xf32> to vector<16x1xf32>
      %27 = arith.mulf %24, %24 : vector<16x32xf32>
      %cst_19 = arith.constant dense<0.000000e+00> : vector<16xf32>
      %28 = vector.multi_reduction <add>, %27, %cst_19 [1] : vector<16x32xf32> to vector<16xf32>
      %29 = vector.shape_cast %28 : vector<16xf32> to vector<16x1xf32>
      %cst_20 = arith.constant 3.125000e-02 : f32
      %30 = vector.broadcast %cst_20 : f32 to vector<16x1xf32>
      %31 = arith.mulf %26, %30 : vector<16x1xf32>
      %cst_21 = arith.constant 3.125000e-02 : f32
      %32 = vector.broadcast %cst_21 : f32 to vector<16x1xf32>
      %33 = arith.mulf %29, %32 : vector<16x1xf32>
      %34 = arith.mulf %31, %31 : vector<16x1xf32>
      %35 = arith.subf %33, %34 : vector<16x1xf32>
      %36 = vector.broadcast %31 : vector<16x1xf32> to vector<16x32xf32>
      %37 = arith.subf %24, %36 : vector<16x32xf32>
      %cst_22 = arith.constant 9.99999974E-6 : f32
      %38 = vector.broadcast %cst_22 : f32 to vector<16x1xf32>
      %39 = arith.addf %35, %38 : vector<16x1xf32>
      %40 = math.rsqrt %39 : vector<16x1xf32>
      %41 = vector.broadcast %40 : vector<16x1xf32> to vector<16x32xf32>
      %42 = arith.mulf %37, %41 : vector<16x32xf32>
      %c0_23 = arith.constant 0 : index
      %c0_24 = arith.constant 0 : index
      %43 = vector.load %arg3[%c0_23, %c0_24] : memref<1x32xf32, #tpu.memory_space<vmem>>, vector<1x32xf32>
      %44 = vector.broadcast %43 : vector<1x32xf32> to vector<16x32xf32>
      %45 = arith.mulf %42, %44 : vector<16x32xf32>
      %c0_25 = arith.constant 0 : index
      %c0_26 = arith.constant 0 : index
      %46 = vector.load %arg4[%c0_25, %c0_26] : memref<1x32xf32, #tpu.memory_space<vmem>>, vector<1x32xf32>
      %47 = vector.broadcast %46 : vector<1x32xf32> to vector<16x32xf32>
      %48 = arith.addf %45, %47 : vector<16x32xf32>
      %49 = arith.truncf %48 : vector<16x32xf32> to vector<16x32xbf16>
      %c0_27 = arith.constant 0 : index
      %c0_28 = arith.constant 0 : index
      %50 = vector.load %arg11[%c0_27, %c0_28] : memref<16x32xbf16, #tpu.memory_space<vmem>>, vector<16x32xbf16>
      tpu.vector_store %arg11[%c0_27, %c0_28], %49 {strides = array<i32>} : memref<16x32xbf16, #tpu.memory_space<vmem>>, vector<16x32xbf16>,
      %cst_29 = arith.constant 0.000000e+00 : f32
      %51 = vector.broadcast %cst_29 : f32 to vector<16x32xf32>
      %c0_30 = arith.constant 0 : index
      %c0_31 = arith.constant 0 : index
      %52 = vector.load %arg10[%c0_30, %c0_31] : memref<16x32xf32, #tpu.memory_space<vmem>>, vector<16x32xf32>
      tpu.vector_store %arg10[%c0_30, %c0_31], %51 {strides = array<i32>} : memref<16x32xf32, #tpu.memory_space<vmem>>, vector<16x32xf32>,
    } else {
    }
    %c0 = arith.constant 0 : index
    %c0_1 = arith.constant 0 : index
    %3 = vector.load %arg11[%c0, %c0_1] : memref<16x32xbf16, #tpu.memory_space<vmem>>, vector<16x32xbf16>
    %c0_2 = arith.constant 0 : index
    %c0_3 = arith.constant 0 : index
    %4 = vector.load %arg5[%c0_2, %c0_3] : memref<32x64xbf16, #tpu.memory_space<vmem>>, vector<32x64xbf16>
    %cst = arith.constant dense<0.000000e+00> : vector<16x64xf32>
    %5 = tpu.matmul %3, %4, %cst {dimension_numbers = #tpu.dot_dimension_numbers<[1], [0], [0], [1], [0, 0, 1, 1], [], []>} : vector<16x32xbf16>, vector<32x64xbf16>, vector<16x64xf32> -> vector<16x64xf32>
    %c0_4 = arith.constant 0 : index
    %c0_5 = arith.constant 0 : index
    %6 = vector.load %arg6[%c0_4, %c0_5] : memref<1x64xf32, #tpu.memory_space<vmem>>, vector<1x64xf32>
    %7 = vector.broadcast %6 : vector<1x64xf32> to vector<16x64xf32>
    %8 = arith.addf %5, %7 : vector<16x64xf32>
    %9 = arith.negf %8 : vector<16x64xf32>
    %10 = math.exp %9 : vector<16x64xf32>
    %cst_6 = arith.constant 1.000000e+00 : f32
    %11 = vector.broadcast %cst_6 : f32 to vector<16x64xf32>
    %12 = arith.addf %11, %10 : vector<16x64xf32>
    %13 = arith.divf %11, %12 : vector<16x64xf32>
    %14 = arith.mulf %8, %13 : vector<16x64xf32>
    %c0_7 = arith.constant 0 : index
    %c0_8 = arith.constant 0 : index
    %15 = vector.load %arg10[%c0_7, %c0_8] : memref<16x32xf32, #tpu.memory_space<vmem>>, vector<16x32xf32>
    %16 = arith.truncf %14 : vector<16x64xf32> to vector<16x64xbf16>
    %c0_9 = arith.constant 0 : index
    %c0_10 = arith.constant 0 : index
    %17 = vector.load %arg7[%c0_9, %c0_10] : memref<64x32xbf16, #tpu.memory_space<vmem>>, vector<64x32xbf16>
    %cst_11 = arith.constant dense<0.000000e+00> : vector<16x32xf32>
    %18 = tpu.matmul %16, %17, %cst_11 {dimension_numbers = #tpu.dot_dimension_numbers<[1], [0], [0], [1], [0, 0, 1, 1], [], []>} : vector<16x64xbf16>, vector<64x32xbf16>, vector<16x32xf32> -> vector<16x32xf32>
    %19 = arith.addf %15, %18 : vector<16x32xf32>
    %c0_12 = arith.constant 0 : index
    %c0_13 = arith.constant 0 : index
    %20 = vector.load %arg10[%c0_12, %c0_13] : memref<16x32xf32, #tpu.memory_space<vmem>>, vector<16x32xf32>
    tpu.vector_store %arg10[%c0_12, %c0_13], %19 {strides = array<i32>} : memref<16x32xf32, #tpu.memory_space<vmem>>, vector<16x32xf32>,
    %c0_i32_14 = arith.constant 0 : i32
    %21 = arith.cmpi eq, %arg1, %c0_i32_14 : i32
    %22 = arith.extui %21 : i1 to i32
    %c0_i32_15 = arith.constant 0 : i32
    %23 = arith.cmpi ne, %22, %c0_i32_15 : i32
    scf.if %23 {
      %c0_16 = arith.constant 0 : index
      %c0_17 = arith.constant 0 : index
      %24 = vector.load %arg10[%c0_16, %c0_17] : memref<16x32xf32, #tpu.memory_space<vmem>>, vector<16x32xf32>
      %c0_18 = arith.constant 0 : index
      %c0_19 = arith.constant 0 : index
      %25 = vector.load %arg8[%c0_18, %c0_19] : memref<1x32xf32, #tpu.memory_space<vmem>>, vector<1x32xf32>
      %26 = vector.broadcast %25 : vector<1x32xf32> to vector<16x32xf32>
      %27 = arith.addf %24, %26 : vector<16x32xf32>
      %c0_20 = arith.constant 0 : index
      %c0_21 = arith.constant 0 : index
      %28 = vector.load %arg9[%c0_20, %c0_21] : memref<16x32xf32, #tpu.memory_space<vmem>>, vector<16x32xf32>
      tpu.vector_store %arg9[%c0_20, %c0_21], %27 {strides = array<i32>} : memref<16x32xf32, #tpu.memory_space<vmem>>, vector<16x32xf32>,
    } else {
    }
    return
  }
  func.func @transform_0(%arg0: i32, %arg1: i32) -> (i32, i32) {
    %c0_i32 = arith.constant 0 : i32
    %c0_i32_0 = arith.constant 0 : i32
    return %arg0, %c0_i32 : i32, i32
  }
  func.func @transform_1(%arg0: i32, %arg1: i32) -> (i32, i32) {
    %c0_i32 = arith.constant 0 : i32
    %c0_i32_0 = arith.constant 0 : i32
    %c0_i32_1 = arith.constant 0 : i32
    return %c0_i32, %c0_i32_0 : i32, i32
  }
  func.func @transform_2(%arg0: i32, %arg1: i32) -> (i32, i32) {
    %c0_i32 = arith.constant 0 : i32
    %c0_i32_0 = arith.constant 0 : i32
    %c0_i32_1 = arith.constant 0 : i32
    return %c0_i32, %c0_i32_0 : i32, i32
  }
  func.func @transform_3(%arg0: i32, %arg1: i32) -> (i32, i32) {
    %c0_i32 = arith.constant 0 : i32
    %c0_i32_0 = arith.constant 0 : i32
    return %c0_i32, %arg1 : i32, i32
  }
  func.func @transform_4(%arg0: i32, %arg1: i32) -> (i32, i32) {
    %c0_i32 = arith.constant 0 : i32
    %c0_i32_0 = arith.constant 0 : i32
    return %c0_i32, %arg1 : i32, i32
  }
  func.func @transform_5(%arg0: i32, %arg1: i32) -> (i32, i32) {
    %c0_i32 = arith.constant 0 : i32
    %c0_i32_0 = arith.constant 0 : i32
    return %arg1, %c0_i32 : i32, i32
  }
  func.func @transform_6(%arg0: i32, %arg1: i32) -> (i32, i32) {
    %c0_i32 = arith.constant 0 : i32
    %c0_i32_0 = arith.constant 0 : i32
    %c0_i32_1 = arith.constant 0 : i32
    return %c0_i32, %c0_i32_0 : i32, i32
  }
  func.func @transform_7(%arg0: i32, %arg1: i32) -> (i32, i32) {
    %c0_i32 = arith.constant 0 : i32
    %c0_i32_0 = arith.constant 0 : i32
    return %arg0, %c0_i32 : i32, i32
  }
}

</mosaic_0001>

<llo_original>
// kernel: tpu_custom_call.1
$region0: #{tpu_custom_call.1}
  #allocation0 [shape = 'u32[]', space=smem, size = 0x4, offset = 0x4, fixed_abs, tag = 'smem constant byte address 0x4 - core index']
  #allocation1 [shape = 'u32[72,128]{1,0:T(1,128)}', space=vmem, size = 0x9000, scoped, tag = 'internal scratch']
  #allocation2 [shape = 'f32[16,32]{1,0:T(8,128)}', space=vmem, size = 0x2000, scoped, tag = 'scratch operand']
  #allocation3 [shape = 'bf16[16,32]{1,0:T(8,128)(2,1)}', space=vmem, size = 0x1000, scoped, tag = 'scratch operand']
  %s0 = inlined_call_operand.vmem [shape: f32[16,32], index: 0, kind: input, shape index: {}]
  %s1 = inlined_call_operand.vmem [shape: f32[1,32], index: 1, kind: input, shape index: {}]
  %s2 = inlined_call_operand.vmem [shape: f32[1,32], index: 2, kind: input, shape index: {}]
  %s3 = inlined_call_operand.vmem [shape: bf16[32,64], index: 3, kind: input, shape index: {}]
  %s4 = inlined_call_operand.vmem [shape: f32[1,64], index: 4, kind: input, shape index: {}]
  %s5 = inlined_call_operand.vmem [shape: bf16[64,32], index: 5, kind: input, shape index: {}]
  %s6 = inlined_call_operand.vmem [shape: f32[1,32], index: 6, kind: input, shape index: {}]
  %s7 = inlined_call_operand.hbm [shape: f32[16,32], index: 7, kind: output, shape index: {}]
  %s8 = sld [smem:[#allocation0]]
  $region46: #{tpu_custom_call.1} parent=0
    _
  %s10 = ssub.s32 1, %s8
  %s11 = scalar_select 0, %s10, %s8
  $region1: #{tpu_custom_call.1} parent=0
    #allocation4 [shape = 'u8[8192]{0}', space=vmem, size = 0x2000, scoped, tag = 'output window, operand 0, single buffered']
    #allocation5 [shape = 's32[1]{0}', space=sflag, size = 0x4, scoped, tag = 'scoped memory for tpu_custom_call.1']
    %12 = vsyncpa [#allocation5], 0
    // Predicated region
    $region2: #{tpu_custom_call.1} parent=1 // pred_check
      _
    $region3: #{tpu_custom_call.1} parent=1 // pred_check_branch
      %14 = sbr.rel (0) target = $region5
    $region4: #{tpu_custom_call.1} parent=1 // pred_region
      _
    $region5: #{tpu_custom_call.1} parent=1 // pred_fallthru
      _
    // Predicated region
    $region6: #{tpu_custom_call.1} parent=1 // pred_check
      _
    $region7: #{tpu_custom_call.1} parent=1 // pred_check_branch
      %16 = sbr.rel (0) target = $region9
    $region8: #{tpu_custom_call.1} parent=1 // pred_region
      _
    $region9: #{tpu_custom_call.1} parent=1 // pred_fallthru
      _
    // Predicated region
    $region10: #{tpu_custom_call.1} parent=1 // pred_check
      _
    $region11: #{tpu_custom_call.1} parent=1 // pred_check_branch
      %18 = sbr.rel (0) target = $region13
    $region12: #{tpu_custom_call.1} parent=1 // pred_region
      _
    $region13: #{tpu_custom_call.1} parent=1 // pred_fallthru
      _
    // Predicated region
    $region14: #{tpu_custom_call.1} parent=1 // pred_check
      _
    $region15: #{tpu_custom_call.1} parent=1 // pred_check_branch
      %20 = sbr.rel (0) target = $region17
    $region16: #{tpu_custom_call.1} parent=1 // pred_region
      _
    $region17: #{tpu_custom_call.1} parent=1 // pred_fallthru
      _
    // Predicated region
    $region18: #{tpu_custom_call.1} parent=1 // pred_check
      _
    $region19: #{tpu_custom_call.1} parent=1 // pred_check_branch
      %22 = sbr.rel (0) target = $region21
    $region20: #{tpu_custom_call.1} parent=1 // pred_region
      _
    $region21: #{tpu_custom_call.1} parent=1 // pred_fallthru
      _
    // Predicated region
    $region22: #{tpu_custom_call.1} parent=1 // pred_check
      _
    $region23: #{tpu_custom_call.1} parent=1 // pred_check_branch
      %24 = sbr.rel (0) target = $region25
    $region24: #{tpu_custom_call.1} parent=1 // pred_region
      _
    $region25: #{tpu_custom_call.1} parent=1 // pred_fallthru
      _
    // Predicated region
    $region26: #{tpu_custom_call.1} parent=1 // pred_check
      _
    $region27: #{tpu_custom_call.1} parent=1 // pred_check_branch
      %26 = sbr.rel (0) target = $region29
    $region28: #{tpu_custom_call.1} parent=1 // pred_region
      _
    $region29: #{tpu_custom_call.1} parent=1 // pred_fallthru
      _
    %p28 = scmp.eq.s32.totalorder 0, 0
    // Predicated region
    $region30: #{tpu_custom_call.1} parent=1 // pred_check
      %p29 = pneg %p28
    $region31: #{tpu_custom_call.1} parent=1 // pred_check_branch
      %31 = sbr.rel (%p29) target = $region33
    $region32: #{tpu_custom_call.1} parent=1 // pred_region
      %v32 = vld [vmem:[%s0] sm:$0xff]
      %v33 = vld [vmem:[%s0 + $0x8] sm:$0xff]
      %vm34 = vcmask 261120
      %v35 = vsel %vm34, %v32, 0.0
      %36 = vadd.xlane.f32.xlu0 %v35
      %v37 = vpop.xlane.xlu0 %36
      %v38 = vsel %vm34, %v33, 0.0
      %39 = vadd.xlane.f32.xlu0 %v38
      %v40 = vpop.xlane.xlu0 %39
      %v41 = vmul.f32 %v32, %v32
      %v42 = vmul.f32 %v33, %v33
      %v43 = vsel %vm34, %v41, 0.0
      %44 = vadd.xlane.f32.xlu0 %v43
      %v45 = vpop.xlane.xlu0 %44
      %v46 = vsel %vm34, %v42, 0.0
      %47 = vadd.xlane.f32.xlu0 %v46
      %v48 = vpop.xlane.xlu0 %47
      %v49 = vmul.f32 %v37, 0.03125
      %v50 = vmul.f32 %v40, 0.03125
      %v51 = vmul.f32 %v45, 0.03125
      %v52 = vmul.f32 %v48, 0.03125
      %v53 = vmul.f32 %v49, %v49
      %v54 = vmul.f32 %v50, %v50
      %v55 = vsub.f32 %v51, %v53
      %v56 = vsub.f32 %v52, %v54
      %v57 = vsub.f32 %v32, %v49
      %v58 = vsub.f32 %v33, %v50
      %v59 = vadd.f32 %v55, 1e-05
      %v60 = vadd.f32 %v56, 1e-05
      %v61 = vrsqrt.pop %v59
      %v62 = vmul.f32 %v61, %v59
      %v63 = vmul.f32 %v62, %v61
      %v64 = vmul.f32 0.5, %v63
      %v65 = vsub.f32 1.5, %v64
      %v66 = vmul.f32 %v61, %v65
      %vm67 = vweird.f32 %v59
      %vm68 = vweird.f32 %v61
      %vm69 = vmor %vm67, %vm68
      %v70 = vsel %vm69, %v61, %v66
      %v71 = vrsqrt.pop %v60
      %v72 = vmul.f32 %v71, %v60
      %v73 = vmul.f32 %v72, %v71
      %v74 = vmul.f32 0.5, %v73
      %v75 = vsub.f32 1.5, %v74
      %v76 = vmul.f32 %v71, %v75
      %vm77 = vweird.f32 %v60
      %vm78 = vweird.f32 %v71
      %vm79 = vmor %vm77, %vm78
      %v80 = vsel %vm79, %v71, %v76
      %v81 = vmul.f32 %v57, %v70
      %v82 = vmul.f32 %v58, %v80
      %v83 = vld [vmem:[%s1] sm:$0x1]
      %v85 = vperm.slane %v83, 0
      %v87 = vmul.f32 %v81, %v85
      %v88 = vmul.f32 %v82, %v85
      %v89 = vld [vmem:[%s2] sm:$0x1]
      %v91 = vperm.slane %v89, 0
      %v93 = vadd.f32 %v87, %v91
      %v94 = vadd.f32 %v88, %v91
      %v95 = vpack.c.bf16 %v93, %v93
      %v96 = vpack.c.bf16 %v94, %v94
      %vm97 = vcmask 257024
      %98 = vst.msk [vmem:[#allocation3] sm:$0xf] %vm97, %v95
      %99 = vst.msk [vmem:[#allocation3 + $0x4] sm:$0xf] %vm97, %v96
      %100 = vst.msk [vmem:[#allocation2] sm:$0xff] %vm34, 0.0
      %101 = vst.msk [vmem:[#allocation2 + $0x8] sm:$0xff] %vm34, 0.0
    $region33: #{tpu_custom_call.1} parent=1 // pred_fallthru
      _
    %v102 = vld [vmem:[#allocation3] sm:$0xf]
    %v103 = vld [vmem:[#allocation3 + $0x4] sm:$0xf]
    %v104 = vld [vmem:[%s3] sm:$0xf]
    %v105 = vld [vmem:[%s3 + $0x4] sm:$0xf]
    %v106 = vld [vmem:[%s3 + $0x8] sm:$0xf]
    %v107 = vld [vmem:[%s3 + $0xc] sm:$0xf]
    %v108 = vld [vmem:[%s4] sm:$0x1]
    %v110 = vperm.slane %v108, 0
    %v114 = vunpack.c.l.b16 %v102
    %v115 = vunpack.c.l.b16 %v103
    %v116 = vpack.c.b16 %v115, %v114
    %v121 = vunpack.c.l.b16 %v104
    %v122 = vunpack.c.l.b16 %v105
    %v123 = vunpack.c.l.b16 %v106
    %v124 = vunpack.c.l.b16 %v107
    %v125 = vpack.c.b16 %v122, %v121
    %v126 = vpack.c.b16 %v124, %v123
    %vm129 = vcmask 261120
    %v131 = vsel %vm129, %v116, 0
    %133 = vmatpush.bf16.msra.mxu0 0
    %134 = vmatpush.bf16.msra.mxu0 0
    %135 = vmatpush.bf16.msra.mxu0 0
    %136 = vmatpush.bf16.msra.mxu0 0
    %137 = vmatpush.bf16.msra.mxu0 0
    %138 = vmatpush.bf16.msra.mxu0 0
    %139 = vmatpush.bf16.msra.mxu0 %v126
    %140 = vmatpush.bf16.msra.mxu0 %v125
    %141 = vmatmul.bf16.gmra.mxu0 %v131
    %v142 = vpop.f32.mrf.mxu0
    %v143 = vadd.f32 %v110, %v142
    %v144 = vpop.f32.mrf.mxu0
    %v145 = vadd.f32 %v110, %v144
    %146 = vdwg.mxu0
    %v147 = vxor.u32 %v143, 2147483648
    %v148 = vxor.u32 %v145, 2147483648
    %v149 = vmul.f32 %v147, 1.442695
    %v150 = vpow.pop %v149
    %v151 = vmul.f32 %v148, 1.442695
    %v152 = vpow.pop %v151
    %v153 = vadd.f32 %v150, 1.0
    %v154 = vadd.f32 %v152, 1.0
    %v155 = vrcp.pop %v153
    %v156 = vmul.f32 %v153, %v155
    %v157 = vsub.f32 1.0, %v156
    %v158 = vmul.f32 %v155, %v157
    %v159 = vadd.f32 %v155, %v158
    %vm160 = vweird.f32 %v153
    %vm161 = vweird.f32 %v155
    %vm162 = vmor %vm160, %vm161
    %v163 = vsel %vm162, %v155, %v159
    %v164 = vand.u32 2147483647, %v153
    %vm165 = vcmp.eq.f32.partialorder %v164, 8.507059e+37
    %v166 = vand.u32 %v153, 2147483648
    %v167 = vor.u32 1.1754944e-38, %v166
    %v168 = vsel %vm165, %v167, %v163
    %v169 = vmul.f32 1.0, %v168
    %v170 = vrcp.pop %v154
    %v171 = vmul.f32 %v154, %v170
    %v172 = vsub.f32 1.0, %v171
    %v173 = vmul.f32 %v170, %v172
    %v174 = vadd.f32 %v170, %v173
    %vm175 = vweird.f32 %v154
    %vm176 = vweird.f32 %v170
    %vm177 = vmor %vm175, %vm176
    %v178 = vsel %vm177, %v170, %v174
    %v179 = vand.u32 2147483647, %v154
    %vm180 = vcmp.eq.f32.partialorder %v179, 8.507059e+37
    %v181 = vand.u32 %v154, 2147483648
    %v182 = vor.u32 1.1754944e-38, %v181
    %v183 = vsel %vm180, %v182, %v178
    %v184 = vmul.f32 1.0, %v183
    %v185 = vmul.f32 %v143, %v169
    %v186 = vmul.f32 %v145, %v184
    %v187 = vld [vmem:[#allocation2] sm:$0xff]
    %v188 = vld [vmem:[#allocation2 + $0x8] sm:$0xff]
    %v189 = vpack.c.bf16 %v186, %v185
    %v190 = vld [vmem:[%s5] sm:$0xf]
    %v191 = vld [vmem:[%s5 + $0x4] sm:$0xf]
    %v192 = vld [vmem:[%s5 + $0x8] sm:$0xf]
    %v193 = vld [vmem:[%s5 + $0xc] sm:$0xf]
    %v194 = vld [vmem:[%s5 + $0x10] sm:$0xf]
    %v195 = vld [vmem:[%s5 + $0x14] sm:$0xf]
    %v196 = vld [vmem:[%s5 + $0x18] sm:$0xf]
    %v197 = vld [vmem:[%s5 + $0x1c] sm:$0xf]
    %v206 = vunpack.c.l.b16 %v190
    %v207 = vunpack.c.l.b16 %v191
    %v208 = vunpack.c.l.b16 %v192
    %v209 = vunpack.c.l.b16 %v193
    %v210 = vunpack.c.l.b16 %v194
    %v211 = vunpack.c.l.b16 %v195
    %v212 = vunpack.c.l.b16 %v196
    %v213 = vunpack.c.l.b16 %v197
    %v214 = vpack.c.b16 %v207, %v206
    %v215 = vpack.c.b16 %v209, %v208
    %v216 = vpack.c.b16 %v211, %v210
    %v217 = vpack.c.b16 %v213, %v212
    %vm222 = vcmask 523264
    %v224 = vsel %vm222, %v189, 0
    %226 = vmatpush.bf16.msra.mxu0 0
    %227 = vmatpush.bf16.msra.mxu0 0
    %228 = vmatpush.bf16.msra.mxu0 0
    %229 = vmatpush.bf16.msra.mxu0 0
    %230 = vmatpush.bf16.msra.mxu0 %v217
    %231 = vmatpush.bf16.msra.mxu0 %v216
    %232 = vmatpush.bf16.msra.mxu0 %v215
    %233 = vmatpush.bf16.msra.mxu0 %v214
    %234 = vmatmul.bf16.gmra.mxu0 %v224
    %v235 = vpop.f32.mrf.mxu0
    %v236 = vadd.f32 0.0, %v235
    %v237 = vpop.f32.mrf.mxu0
    %v238 = vadd.f32 0.0, %v237
    %239 = vdwg.mxu0
    %v240 = vadd.f32 %v187, %v236
    %v241 = vadd.f32 %v188, %v238
    %242 = vst.msk [vmem:[#allocation2] sm:$0xff] %vm129, %v240
    %243 = vst.msk [vmem:[#allocation2 + $0x8] sm:$0xff] %vm129, %v241
    // Predicated region
    $region34: #{tpu_custom_call.1} parent=1 // pred_check
      %p244 = pneg %p28
    $region35: #{tpu_custom_call.1} parent=1 // pred_check_branch
      %246 = sbr.rel (%p244) target = $region37
    $region36: #{tpu_custom_call.1} parent=1 // pred_region
      %v247 = vld [vmem:[#allocation2] sm:$0xff]
      %v248 = vld [vmem:[#allocation2 + $0x8] sm:$0xff]
      %v249 = vld [vmem:[%s6] sm:$0x1]
      %v251 = vperm.slane %v249, 0
      %v253 = vadd.f32 %v247, %v251
      %v254 = vadd.f32 %v248, %v251
      %255 = vst.msk [vmem:[#allocation4] sm:$0xff] %vm129, %v253
      %256 = vst.msk [vmem:[#allocation4 + $0x8] sm:$0xff] %vm129, %v254
    $region37: #{tpu_custom_call.1} parent=1 // pred_fallthru
      _
    // Predicated region
    $region38: #{tpu_custom_call.1} parent=1 // pred_check
      _
    $region39: #{tpu_custom_call.1} parent=1 // pred_check_branch
      %258 = sbr.rel (0) target = $region41
    $region40: #{tpu_custom_call.1} parent=1 // pred_region
      %260 = vsyncadd [#allocation5], 0
      %s261 = sshll.u32 [#allocation4], 4
      %s262 = int_to_ptr.vmem [resolvable:$true] %s261
      %s263 = sshll.u32 %s7, 4
      %s264 = int_to_ptr.hbm [resolvable:$true] %s263
      %269 = dma.vmem_to_hbm [thread:$0]  %s262, 256, %s264, [#allocation5], 128, 128, 8
    $region41: #{tpu_custom_call.1} parent=1 // pred_fallthru
      _
    // Predicated region
    $region42: #{tpu_custom_call.1} parent=1 // pred_check
      _
    $region43: #{tpu_custom_call.1} parent=1 // pred_check_branch
      %271 = sbr.rel (0) target = $region45
    $region44: #{tpu_custom_call.1} parent=1 // pred_region
      %273 = dma.done [#allocation5], 256
    $region45: #{tpu_custom_call.1} parent=1 // pred_fallthru
      _
    %274 = vsyncpa [#allocation5], 1

</llo_original>
